<compile_context>
chip_gen: v5e
topology: v5e:2x2
jax: 0.10.0
libtpu: 0.0.40
codegen_flags: <defaults>
</compile_context>

<pallas_src>
import functools

import jax
import jax.numpy as jnp
from jax.experimental import pallas as pl
from jax.experimental.pallas import tpu as pltpu


def autoencoder_kernel(x_ref, w1_ref, b1_ref, w23_ref, b23_ref, o_ref):
    # Cast the activation tile to the compute dtype in-kernel (VPU cast on a
    # VMEM-resident tile; avoids an extra HBM pass in the wrapper).
    x = x_ref[...].astype(w1_ref.dtype)
    # encoder: Linear(D, 32) + ReLU, f32 accumulation / f32 bias & ReLU
    h = jnp.dot(x, w1_ref[...], preferred_element_type=jnp.float32) + b1_ref[...]
    h = jnp.maximum(h, 0.0)
    # folded decoder: Linear(32, D) then Linear(D, D), no activation between
    #   == h @ (w2 @ w3) + (b2 @ w3 + b3)
    out = jnp.dot(h.astype(w23_ref.dtype), w23_ref[...],
                  preferred_element_type=jnp.float32) + b23_ref[...]
    o_ref[...] = out.astype(o_ref.dtype)


def prepare_params(params, *, compute_dtype=jnp.float32):
    """One-time prep: fold the two activation-free decoder linears (in f32,
    algebraically exact) and cast weights to the kernel compute dtype.
    Call once per parameter set; reuse the result for every forward call."""
    w2 = params["w2"].astype(jnp.float32)
    w3 = params["w3"].astype(jnp.float32)
    w23 = w2 @ w3                                            # [32, D]
    b23 = params["b2"].astype(jnp.float32) @ w3 + params["b3"].astype(jnp.float32)
    return dict(
        w1=params["w1"].astype(compute_dtype),               # [D, 32]
        b1=params["b1"].astype(jnp.float32).reshape(1, -1),  # [1, 32]
        w23=w23.astype(compute_dtype),                       # [32, D]
        b23=b23.astype(jnp.float32).reshape(1, -1),          # [1, D]
    )


def _tile_and_vmem_plan(B, D, H, x_bytes, compute_bytes, out_bytes, requested_tile):
    """Static (trace-time) choice of batch tile + scoped-VMEM limit."""
    try:
        cap = int(pltpu.get_tpu_info().vmem_capacity_bytes)
    except Exception:  # be robust if HW query is unavailable
        cap = 64 * 1024 * 1024                       # v7x per-TC (smallest)
    budget = min(cap * 3 // 4, 96 * 1024 * 1024)     # ~48 MiB v7x, ~96 MiB v5e/v6e

    align = 16 if compute_bytes < 4 else 8           # bf16 packs 16 rows/vreg
    # single-buffered resident weights + biases
    weight_bytes = 2 * D * H * compute_bytes + (H + D) * 4
    # per batch row: double-buffered x & out tiles + f32 in-kernel temporaries
    per_row = D * (2 * x_bytes + 2 * out_bytes + 4) + H * 4

    fit = max(align, (budget - weight_bytes) // max(per_row, 1))
    tile = 512 if requested_tile is None else int(requested_tile)
    tile = min(tile, int(fit))

    # keep >= 2 grid steps when the batch allows it (v7x has 2 TCs to feed)
    half = -(-B // 2)
    if half >= align:
        tile = min(tile, -(-half // align) * align)

    tile = max(align, (tile // align) * align)       # sublane-aligned M tile

    footprint = weight_bytes + tile * per_row
    vmem_limit = int(min(max(footprint * 5 // 4, 16 * 1024 * 1024), budget))
    return int(tile), vmem_limit


@functools.partial(jax.jit, static_argnames=("tile_b", "out_dtype"))
def autoencoder_forward(x, prepared, *, tile_b=None, out_dtype=None):
    """x: [B, D]. prepared: output of prepare_params (w1,b1,w23,b23).
    Weights are stored [in, out] so y = x @ W + b matches nn.Linear."""
    B, D = x.shape
    D_w, H = prepared["w1"].shape
    assert D_w == D, "prepared params do not match input feature dim"
    out_dtype = x.dtype if out_dtype is None else out_dtype
    compute_dtype = prepared["w1"].dtype

    x_bytes = jnp.dtype(x.dtype).itemsize
    c_bytes = jnp.dtype(compute_dtype).itemsize
    o_bytes = jnp.dtype(out_dtype).itemsize
    tile_b, vmem_limit = _tile_and_vmem_plan(B, D, H, x_bytes, c_bytes, o_bytes, tile_b)

    grid = (pl.cdiv(B, tile_b),)

    cost = pl.CostEstimate(
        flops=int(4 * B * D * H),                         # two B x D x H matmuls
        transcendentals=0,
        bytes_accessed=int(B * D * (x_bytes + o_bytes) + 2 * D * H * c_bytes + (H + D) * 4),
    )

    return pl.pallas_call(
        autoencoder_kernel,
        out_shape=jax.ShapeDtypeStruct((B, D), out_dtype),
        grid=grid,
        in_specs=[
            # activation tile: double-buffered over the batch grid;
            # last dim is the full feature extent -> no feature padding needed,
            # partial edge blocks on the batch axis are masked by Pallas.
            pl.BlockSpec((tile_b, D), lambda i: (i, 0)),
            # weights/biases: constant block index -> VMEM-resident, single buffer
            pl.BlockSpec((D, H), lambda i: (0, 0), pipeline_mode=pl.Buffered(1)),
            pl.BlockSpec((1, H), lambda i: (0, 0), pipeline_mode=pl.Buffered(1)),
            pl.BlockSpec((H, D), lambda i: (0, 0), pipeline_mode=pl.Buffered(1)),
            pl.BlockSpec((1, D), lambda i: (0, 0), pipeline_mode=pl.Buffered(1)),
        ],
        out_specs=pl.BlockSpec((tile_b, D), lambda i: (i, 0)),
        compiler_params=pltpu.CompilerParams(
            dimension_semantics=("parallel",),            # megacore on v7x
            vmem_limit_bytes=vmem_limit,
        ),
        cost_estimate=cost,
    )(x, prepared["w1"], prepared["b1"], prepared["w23"], prepared["b23"])


def init_params(key, input_dim, hidden=32):
    """Deterministic synthetic init (PyTorch-Linear-like uniform bounds)."""
    ks = jax.random.split(key, 6)

    def lin(kw, kb, fan_in, fan_out):
        bound = 1.0 / jnp.sqrt(jnp.float32(fan_in))
        # weight stored as [in, out] (transpose of PyTorch's [out, in])
        w = jax.random.uniform(kw, (fan_in, fan_out), jnp.float32,
                               minval=-bound, maxval=bound)
        b = jax.random.uniform(kb, (1, fan_out), jnp.float32,
                               minval=-bound, maxval=bound)
        return w, b

    w1, b1 = lin(ks[0], ks[1], input_dim, hidden)      # encoder Linear(D, 32)
    w2, b2 = lin(ks[2], ks[3], hidden, input_dim)      # decoder Linear(32, D)
    w3, b3 = lin(ks[4], ks[5], input_dim, input_dim)   # decoder Linear(D, D)
    return dict(w1=w1, b1=b1, w2=w2, b2=b2, w3=w3, b3=b3)


def reference_forward(x, p):
    h = jnp.maximum(x @ p["w1"] + p["b1"], 0.0)
    d = h @ p["w2"] + p["b2"]
    return d @ p["w3"] + p["b3"]


if __name__ == "__main__":
    key = jax.random.PRNGKey(0)
    k_x1, k_x2, k_p1, k_p2 = jax.random.split(key, 4)

    # --- Test A: ragged everything (f32 compute) --------------------------
    # B=13 (not a multiple of the 8-row tile -> exercises masked edge block),
    # D=64 (not 128 -> exercises full-extent last-dim block, no padding pass).
    B1, D1 = 13, 64
    x1 = jax.random.normal(k_x1, (B1, D1), dtype=jnp.float32)
    params1 = init_params(k_p1, D1)
    prep1 = prepare_params(params1, compute_dtype=jnp.float32)   # one-time fold
    ref1 = reference_forward(x1, params1)

    out1 = autoencoder_forward(x1, prep1, tile_b=8)   # grid = 2 steps
    out1 = jax.block_until_ready(out1)
    assert out1.shape == (B1, D1) and out1.dtype == jnp.float32
    assert jnp.allclose(out1, ref1, atol=1e-4, rtol=1e-4)

    # --- Test B: lane-aligned bf16 path (valid on v5e/v6e/v7x) -------------
    # bf16 MXU operands + bf16 output writeback, f32 accumulation and f32
    # bias/ReLU inside the kernel.  auto tile_b -> >=2 grid steps.
    B2, D2 = 32, 128
    x2 = jax.random.normal(k_x2, (B2, D2), dtype=jnp.float32)
    params2 = init_params(k_p2, D2)
    prep2 = prepare_params(params2, compute_dtype=jnp.bfloat16)  # fold kept in f32
    ref2 = reference_forward(x2, params2)

    out2 = autoencoder_forward(x2, prep2, out_dtype=jnp.bfloat16)
    out2 = jax.block_until_ready(out2)
    assert out2.shape == (B2, D2) and out2.dtype == jnp.bfloat16
    # bf16 operands + bf16 fold-cast + bf16 writeback: loose tolerance
    # (error grows slowly with D; keep the fold itself in f32 as done above).
    assert jnp.allclose(out2.astype(jnp.float32), ref2, atol=7e-2, rtol=7e-2)

    print("KERNEL_OK")
</pallas_src>

<mosaic_0001>
module attributes {stable_mosaic.version = 11 : i64} {
  func.func @autoencoder_kernel(%arg0: i32, %arg1: memref<8x64xf32, #tpu.memory_space<vmem>>, %arg2: memref<64x32xf32, #tpu.memory_space<vmem>>, %arg3: memref<1x32xf32, #tpu.memory_space<vmem>>, %arg4: memref<32x64xf32, #tpu.memory_space<vmem>>, %arg5: memref<1x64xf32, #tpu.memory_space<vmem>>, %arg6: memref<8x64xf32, #tpu.memory_space<vmem>>) attributes {dimension_semantics = [#tpu.dimension_semantics<parallel>], iteration_bounds = array<i64: 2>, scalar_prefetch = 0 : i64, scratch_operands = 0 : i64, tpu.core_type = #tpu.core_type<tc>, window_params = [{transform_indices = @transform_0, window_bounds = array<i64: 8, 64>}, {pipeline_mode = #tpu.pipeline_mode<synchronous>, transform_indices = @transform_1, window_bounds = array<i64: 64, 32>}, {pipeline_mode = #tpu.pipeline_mode<synchronous>, transform_indices = @transform_2, window_bounds = array<i64: 1, 32>}, {pipeline_mode = #tpu.pipeline_mode<synchronous>, transform_indices = @transform_3, window_bounds = array<i64: 32, 64>}, {pipeline_mode = #tpu.pipeline_mode<synchronous>, transform_indices = @transform_4, window_bounds = array<i64: 1, 64>}, {transform_indices = @transform_5, window_bounds = array<i64: 8, 64>}]} {
    %c0 = arith.constant 0 : index
    %c0_0 = arith.constant 0 : index
    %0 = vector.load %arg1[%c0, %c0_0] : memref<8x64xf32, #tpu.memory_space<vmem>>, vector<8x64xf32>
    %c0_1 = arith.constant 0 : index
    %c0_2 = arith.constant 0 : index
    %1 = vector.load %arg2[%c0_1, %c0_2] : memref<64x32xf32, #tpu.memory_space<vmem>>, vector<64x32xf32>
    %cst = arith.constant dense<0.000000e+00> : vector<8x32xf32>
    %2 = tpu.matmul %0, %1, %cst {dimension_numbers = #tpu.dot_dimension_numbers<[1], [0], [0], [1], [0, 0, 1, 1], [], []>} : vector<8x64xf32>, vector<64x32xf32>, vector<8x32xf32> -> vector<8x32xf32>
    %c0_3 = arith.constant 0 : index
    %c0_4 = arith.constant 0 : index
    %3 = vector.load %arg3[%c0_3, %c0_4] : memref<1x32xf32, #tpu.memory_space<vmem>>, vector<1x32xf32>
    %4 = vector.broadcast %3 : vector<1x32xf32> to vector<8x32xf32>
    %5 = arith.addf %2, %4 : vector<8x32xf32>
    %cst_5 = arith.constant 0.000000e+00 : f32
    %6 = vector.broadcast %cst_5 : f32 to vector<8x32xf32>
    %7 = arith.maximumf %5, %6 : vector<8x32xf32>
    %c0_6 = arith.constant 0 : index
    %c0_7 = arith.constant 0 : index
    %8 = vector.load %arg4[%c0_6, %c0_7] : memref<32x64xf32, #tpu.memory_space<vmem>>, vector<32x64xf32>
    %cst_8 = arith.constant dense<0.000000e+00> : vector<8x64xf32>
    %9 = tpu.matmul %7, %8, %cst_8 {dimension_numbers = #tpu.dot_dimension_numbers<[1], [0], [0], [1], [0, 0, 1, 1], [], []>} : vector<8x32xf32>, vector<32x64xf32>, vector<8x64xf32> -> vector<8x64xf32>
    %c0_9 = arith.constant 0 : index
    %c0_10 = arith.constant 0 : index
    %10 = vector.load %arg5[%c0_9, %c0_10] : memref<1x64xf32, #tpu.memory_space<vmem>>, vector<1x64xf32>
    %11 = vector.broadcast %10 : vector<1x64xf32> to vector<8x64xf32>
    %12 = arith.addf %9, %11 : vector<8x64xf32>
    %c0_11 = arith.constant 0 : index
    %c0_12 = arith.constant 0 : index
    %13 = vector.load %arg6[%c0_11, %c0_12] : memref<8x64xf32, #tpu.memory_space<vmem>>, vector<8x64xf32>
    tpu.vector_store %arg6[%c0_11, %c0_12], %12 {strides = array<i32>} : memref<8x64xf32, #tpu.memory_space<vmem>>, vector<8x64xf32>,
    return
  }
  func.func @transform_0(%arg0: i32) -> (i32, i32) {
    %c0_i32 = arith.constant 0 : i32
    %c0_i32_0 = arith.constant 0 : i32
    return %arg0, %c0_i32 : i32, i32
  }
  func.func @transform_1(%arg0: i32) -> (i32, i32) {
    %c0_i32 = arith.constant 0 : i32
    %c0_i32_0 = arith.constant 0 : i32
    %c0_i32_1 = arith.constant 0 : i32
    return %c0_i32, %c0_i32_0 : i32, i32
  }
  func.func @transform_2(%arg0: i32) -> (i32, i32) {
    %c0_i32 = arith.constant 0 : i32
    %c0_i32_0 = arith.constant 0 : i32
    %c0_i32_1 = arith.constant 0 : i32
    return %c0_i32, %c0_i32_0 : i32, i32
  }
  func.func @transform_3(%arg0: i32) -> (i32, i32) {
    %c0_i32 = arith.constant 0 : i32
    %c0_i32_0 = arith.constant 0 : i32
    %c0_i32_1 = arith.constant 0 : i32
    return %c0_i32, %c0_i32_0 : i32, i32
  }
  func.func @transform_4(%arg0: i32) -> (i32, i32) {
    %c0_i32 = arith.constant 0 : i32
    %c0_i32_0 = arith.constant 0 : i32
    %c0_i32_1 = arith.constant 0 : i32
    return %c0_i32, %c0_i32_0 : i32, i32
  }
  func.func @transform_5(%arg0: i32) -> (i32, i32) {
    %c0_i32 = arith.constant 0 : i32
    %c0_i32_0 = arith.constant 0 : i32
    return %arg0, %c0_i32 : i32, i32
  }
}

</mosaic_0001>

<llo_original>
// kernel: autoencoder_forward.1
$region0: #{autoencoder_forward.1}
  #allocation0 [shape = 'u32[]', space=smem, size = 0x4, offset = 0x4, fixed_abs, tag = 'smem constant byte address 0x4 - core index']
  #allocation1 [shape = 'u32[72,128]{1,0:T(1,128)}', space=vmem, size = 0x9000, scoped, tag = 'internal scratch']
  %s0 = inlined_call_operand.vmem [shape: f32[13,64], index: 0, kind: input, shape index: {}]
  %s1 = inlined_call_operand.vmem [shape: f32[64,32], index: 1, kind: input, shape index: {}]
  %s2 = inlined_call_operand.vmem [shape: f32[1,32], index: 2, kind: input, shape index: {}]
  %s3 = inlined_call_operand.vmem [shape: f32[32,64], index: 3, kind: input, shape index: {}]
  %s4 = inlined_call_operand.vmem [shape: f32[1,64], index: 4, kind: input, shape index: {}]
  %s5 = inlined_call_operand.hbm [shape: f32[13,64], index: 5, kind: output, shape index: {}]
  %s6 = sld [smem:[#allocation0]]
  $region53: #{autoencoder_forward.1} parent=0
    _
  %s8 = ssub.s32 1, %s6
  %s9 = scalar_select 0, %s8, %s6
  $region1: #{autoencoder_forward.1} parent=0
    #allocation2 [shape = 'u8[8192]{0}', space=vmem, size = 0x2000, scoped, tag = 'output window, operand 0']
    #allocation3 [shape = 's32[2]{0}', space=sflag, size = 0x8, scoped, tag = 'scoped memory for autoencoder_forward.1']
    %10 = vsyncpa [#allocation3], 0
    %s11 = scalar_lea.sflag [#allocation3], 1
    %12 = vsyncpa %s11, 0
    loop: start=0, step=1, limit=4
    $region2: #{autoencoder_forward.1} parent=1 // loop_pre_header
      _
    $region3: #{autoencoder_forward.1} parent=1 // loop_header
      %s14 = sphi 0, %s18
      %p15 = scmp.ge.s32.totalorder %s14, 4
      %s24 = sphi 0, %s26
      %s27 = sphi 0, %s24
      %s28 = sphi 0, %s27
      %s44 = sphi 0, %s28
      %s48 = sphi 0, %s48
      %s50 = sphi 0, %s48
      %s51 = sphi 0, %s50
      %s65 = sphi 0, %s51
      %s69 = sphi 0, %s69
      %s71 = sphi 0, %s69
      %s72 = sphi 0, %s71
      %s86 = sphi 0, %s72
      %s90 = sphi 0, %s90
      %s92 = sphi 0, %s90
      %s93 = sphi 0, %s92
      %s107 = sphi 0, %s93
      %s111 = sphi 0, %s111
      %s113 = sphi 0, %s111
      %s114 = sphi 0, %s113
      %s128 = sphi 0, %s114
      %s134 = sphi 0, %s136
      %s137 = sphi 0, %s134
      %s138 = sphi 0, %s137
      %s154 = sphi 0, %s138
    $region4: #{autoencoder_forward.1} parent=1 // loop_header_branch
      %17 = sbr.rel (%p15) target = $region8
    $region5: #{autoencoder_forward.1} parent=1 // loop_body
      %s19 = ssub.s32 %s14, 1
      %s20 = ssub.s32 %s14, 2
      %s21 = sadd.s32 %s14, 1
      %s22 = ssub.s32 %s14, %s21
      %p23 = scmp.eq.s32.totalorder %s22, 0
      %s25 = sadd.s32 %s24, 1
      %s26 = scalar_select %p23, %s24, %s25
      %p29 = pneg %p23
      %p30 = scmp.eq.s32.totalorder %s14, 1
      %p31 = por %p29, %p30
      %p32 = scmp.ne.s32.totalorder %s24, %s27
      %p33 = scmp.eq.s32.totalorder %s14, 0
      %p34 = por %p32, %p33
      %p35 = scmp.ne.s32.totalorder %s24, %s27
      %p36 = scmp.eq.s32.totalorder %s19, 1
      %p37 = por %p35, %p36
      %p38 = scmp.ne.s32.totalorder %s27, %s28
      %p39 = scmp.eq.s32.totalorder %s19, 0
      %p40 = por %p38, %p39
      %p41 = scmp.ne.s32.totalorder %s27, %s28
      %p42 = scmp.eq.s32.totalorder %s20, 1
      %p43 = por %p41, %p42
      %p45 = scmp.ne.s32.totalorder %s28, %s44
      %p46 = scmp.eq.s32.totalorder %s20, 0
      %p47 = por %p45, %p46
      %s49 = sadd.s32 %s48, 1
      %p52 = scmp.eq.s32.totalorder %s14, 1
      %p53 = scmp.ne.s32.totalorder %s48, %s50
      %p54 = scmp.eq.s32.totalorder %s14, 0
      %p55 = por %p53, %p54
      %p56 = scmp.ne.s32.totalorder %s48, %s50
      %p57 = scmp.eq.s32.totalorder %s19, 1
      %p58 = por %p56, %p57
      %p59 = scmp.ne.s32.totalorder %s50, %s51
      %p60 = scmp.eq.s32.totalorder %s19, 0
      %p61 = por %p59, %p60
      %p62 = scmp.ne.s32.totalorder %s50, %s51
      %p63 = scmp.eq.s32.totalorder %s20, 1
      %p64 = por %p62, %p63
      %p66 = scmp.ne.s32.totalorder %s51, %s65
      %p67 = scmp.eq.s32.totalorder %s20, 0
      %p68 = por %p66, %p67
      %s70 = sadd.s32 %s69, 1
      %p73 = scmp.eq.s32.totalorder %s14, 1
      %p74 = scmp.ne.s32.totalorder %s69, %s71
      %p75 = scmp.eq.s32.totalorder %s14, 0
      %p76 = por %p74, %p75
      %p77 = scmp.ne.s32.totalorder %s69, %s71
      %p78 = scmp.eq.s32.totalorder %s19, 1
      %p79 = por %p77, %p78
      %p80 = scmp.ne.s32.totalorder %s71, %s72
      %p81 = scmp.eq.s32.totalorder %s19, 0
      %p82 = por %p80, %p81
      %p83 = scmp.ne.s32.totalorder %s71, %s72
      %p84 = scmp.eq.s32.totalorder %s20, 1
      %p85 = por %p83, %p84
      %p87 = scmp.ne.s32.totalorder %s72, %s86
      %p88 = scmp.eq.s32.totalorder %s20, 0
      %p89 = por %p87, %p88
      %s91 = sadd.s32 %s90, 1
      %p94 = scmp.eq.s32.totalorder %s14, 1
      %p95 = scmp.ne.s32.totalorder %s90, %s92
      %p96 = scmp.eq.s32.totalorder %s14, 0
      %p97 = por %p95, %p96
      %p98 = scmp.ne.s32.totalorder %s90, %s92
      %p99 = scmp.eq.s32.totalorder %s19, 1
      %p100 = por %p98, %p99
      %p101 = scmp.ne.s32.totalorder %s92, %s93
      %p102 = scmp.eq.s32.totalorder %s19, 0
      %p103 = por %p101, %p102
      %p104 = scmp.ne.s32.totalorder %s92, %s93
      %p105 = scmp.eq.s32.totalorder %s20, 1
      %p106 = por %p104, %p105
      %p108 = scmp.ne.s32.totalorder %s93, %s107
      %p109 = scmp.eq.s32.totalorder %s20, 0
      %p110 = por %p108, %p109
      %s112 = sadd.s32 %s111, 1
      %p115 = scmp.eq.s32.totalorder %s14, 1
      %p116 = scmp.ne.s32.totalorder %s111, %s113
      %p117 = scmp.eq.s32.totalorder %s14, 0
      %p118 = por %p116, %p117
      %p119 = scmp.ne.s32.totalorder %s111, %s113
      %p120 = scmp.eq.s32.totalorder %s19, 1
      %p121 = por %p119, %p120
      %p122 = scmp.ne.s32.totalorder %s113, %s114
      %p123 = scmp.eq.s32.totalorder %s19, 0
      %p124 = por %p122, %p123
      %p125 = scmp.ne.s32.totalorder %s113, %s114
      %p126 = scmp.eq.s32.totalorder %s20, 1
      %p127 = por %p125, %p126
      %p129 = scmp.ne.s32.totalorder %s114, %s128
      %p130 = scmp.eq.s32.totalorder %s20, 0
      %p131 = por %p129, %p130
      %s132 = ssub.s32 %s14, %s21
      %p133 = scmp.eq.s32.totalorder %s132, 0
      %s135 = sadd.s32 %s134, 1
      %s136 = scalar_select %p133, %s134, %s135
      %p139 = pneg %p133
      %p140 = scmp.eq.s32.totalorder %s14, 1
      %p141 = por %p139, %p140
      %p142 = scmp.ne.s32.totalorder %s134, %s137
      %p143 = scmp.eq.s32.totalorder %s14, 0
      %p144 = por %p142, %p143
      %p145 = scmp.ne.s32.totalorder %s134, %s137
      %p146 = scmp.eq.s32.totalorder %s19, 1
      %p147 = por %p145, %p146
      %p148 = scmp.ne.s32.totalorder %s137, %s138
      %p149 = scmp.eq.s32.totalorder %s19, 0
      %p150 = por %p148, %p149
      %p151 = scmp.ne.s32.totalorder %s137, %s138
      %p152 = scmp.eq.s32.totalorder %s20, 1
      %p153 = por %p151, %p152
      %p155 = scmp.ne.s32.totalorder %s138, %s154
      %p156 = scmp.eq.s32.totalorder %s20, 0
      %p157 = por %p155, %p156
      %p158 = scmp.le.s32.totalorder 1, %s14
      %p159 = scmp.lt.s32.totalorder %s14, 3
      %p160 = pnand %p158, %p159
      %p161 = pneg %p160
      // Predicated region
      $region9: #{autoencoder_forward.1} parent=5 // pred_check
        _
      $region10: #{autoencoder_forward.1} parent=5 // pred_check_branch
        %163 = sbr.rel (%p160) target = $region12
      $region11: #{autoencoder_forward.1} parent=5 // pred_region
        %s164 = ssub.s32 %s14, 1
        // Predicated region
        $region13: #{autoencoder_forward.1} parent=11 // pred_check
          %p165 = pneg %p61
        $region14: #{autoencoder_forward.1} parent=11 // pred_check_branch
          %167 = sbr.rel (%p165) target = $region16
        $region15: #{autoencoder_forward.1} parent=11 // pred_region
          _
        $region16: #{autoencoder_forward.1} parent=11 // pred_fallthru
          _
        // Predicated region
        $region17: #{autoencoder_forward.1} parent=11 // pred_check
          %p168 = pneg %p82
        $region18: #{autoencoder_forward.1} parent=11 // pred_check_branch
          %170 = sbr.rel (%p168) target = $region20
        $region19: #{autoencoder_forward.1} parent=11 // pred_region
          _
        $region20: #{autoencoder_forward.1} parent=11 // pred_fallthru
          _
        // Predicated region
        $region21: #{autoencoder_forward.1} parent=11 // pred_check
          %p171 = pneg %p103
        $region22: #{autoencoder_forward.1} parent=11 // pred_check_branch
          %173 = sbr.rel (%p171) target = $region24
        $region23: #{autoencoder_forward.1} parent=11 // pred_region
          _
        $region24: #{autoencoder_forward.1} parent=11 // pred_fallthru
          _
        // Predicated region
        $region25: #{autoencoder_forward.1} parent=11 // pred_check
          %p174 = pneg %p124
        $region26: #{autoencoder_forward.1} parent=11 // pred_check_branch
          %176 = sbr.rel (%p174) target = $region28
        $region27: #{autoencoder_forward.1} parent=11 // pred_region
          _
        $region28: #{autoencoder_forward.1} parent=11 // pred_fallthru
          _
      $region12: #{autoencoder_forward.1} parent=5 // pred_fallthru
        _
      %p177 = scmp.lt.s32.totalorder %s14, 2
      // Predicated region
      $region29: #{autoencoder_forward.1} parent=5 // pred_check
        %p178 = pneg %p177
      $region30: #{autoencoder_forward.1} parent=5 // pred_check_branch
        %180 = sbr.rel (%p178) target = $region32
      $region31: #{autoencoder_forward.1} parent=5 // pred_region
        // Predicated region
        $region33: #{autoencoder_forward.1} parent=31 // pred_check
          %p181 = pneg %p34
        $region34: #{autoencoder_forward.1} parent=31 // pred_check_branch
          %183 = sbr.rel (%p181) target = $region36
        $region35: #{autoencoder_forward.1} parent=31 // pred_region
          %p184 = scmp.lt.s32.totalorder %s14, 1
          %s185 = scalar_select %p184, %s14, 1
          %s186 = smul.addr %s185, 8
          %s187 = scalar_lea.vmem %s0, %s186
        $region36: #{autoencoder_forward.1} parent=31 // pred_fallthru
          _
      $region32: #{autoencoder_forward.1} parent=5 // pred_fallthru
        _
      %p188 = scmp.le.s32.totalorder 1, %s14
      %p189 = scmp.lt.s32.totalorder %s14, 3
      %p190 = pnand %p188, %p189
      %p191 = pneg %p190
      // Predicated region
      $region37: #{autoencoder_forward.1} parent=5 // pred_check
        _
      $region38: #{autoencoder_forward.1} parent=5 // pred_check_branch
        %193 = sbr.rel (%p190) target = $region40
      $region39: #{autoencoder_forward.1} parent=5 // pred_region
        %s194 = ssub.s32 %s14, 1
        %p195 = scmp.lt.s32.totalorder %s19, 1
        %s196 = scalar_select %p195, %s19, 1
        %s197 = smul.addr %s196, 8
        %s198 = scalar_lea.vmem %s0, %s197
        %p199 = pneg %p40
        %p200 = pneg %p37
        %p201 = pneg %p61
        %p202 = pneg %p58
        %p203 = pneg %p82
        %p204 = pneg %p79
        %p205 = pneg %p103
        %p206 = pneg %p100
        %p207 = pneg %p124
        %p208 = pneg %p121
        %p209 = pneg %p150
        %p210 = pneg %p147
        %s211 = sand.u32 %s137, 1
        %s212 = scalar_lea.sflag [#allocation3], %s211
        %s213 = sand.u32 %s137, 1
        %s214 = smul.addr %s213, 8
        %s215 = scalar_lea.vmem [#allocation2], %s214
        %p216 = scmp.lt.s32.totalorder %s19, 1
        %s217 = scalar_select %p216, %s19, 1
        %s218 = smul.addr %s217, 8
        %s219 = scalar_lea.vmem %s0, %s218
        %v220 = vld [vmem:[%s219] sm:$0xff]
        %v221 = vld [vmem:[%s1] sm:$0xff]
        %v222 = vld [vmem:[%s1 + $0x8] sm:$0xff]
        %v223 = vld [vmem:[%s1 + $0x10] sm:$0xff]
        %v224 = vld [vmem:[%s1 + $0x18] sm:$0xff]
        %v225 = vld [vmem:[%s1 + $0x20] sm:$0xff]
        %v226 = vld [vmem:[%s1 + $0x28] sm:$0xff]
        %v227 = vld [vmem:[%s1 + $0x30] sm:$0xff]
        %v228 = vld [vmem:[%s1 + $0x38] sm:$0xff]
        %v229 = vld [vmem:[%s2] sm:$0x1]
        %v231 = vperm.slane %v229, 0
        %vm233 = vcmask 523264
        %v235 = vsel %vm233, %v220, 0
        %237 = vmatpush.msra.mxu0 0.0
        %238 = vmatpush.msra.mxu0 0.0
        %239 = vmatpush.msra.mxu0 0.0
        %240 = vmatpush.msra.mxu0 0.0
        %241 = vmatpush.msra.mxu0 0.0
        %242 = vmatpush.msra.mxu0 0.0
        %243 = vmatpush.msra.mxu0 0.0
        %244 = vmatpush.msra.mxu0 0.0
        %245 = vmatpush.msra.mxu0 %v228
        %246 = vmatpush.msra.mxu0 %v227
        %247 = vmatpush.msra.mxu0 %v226
        %248 = vmatpush.msra.mxu0 %v225
        %249 = vmatpush.msra.mxu0 %v224
        %250 = vmatpush.msra.mxu0 %v223
        %251 = vmatpush.msra.mxu0 %v222
        %252 = vmatpush.msra.mxu0 %v221
        %253 = vmatmul.f32.gmra.mxu0 %v235
        %v254 = vpop.f32.mrf.mxu0
        %v255 = vadd.f32 %v231, %v254
        %256 = vdwg.mxu0
        %v257 = vmax.f32 %v255, 0.0
        %v258 = vld [vmem:[%s3] sm:$0xff]
        %v259 = vld [vmem:[%s3 + $0x8] sm:$0xff]
        %v260 = vld [vmem:[%s3 + $0x10] sm:$0xff]
        %v261 = vld [vmem:[%s3 + $0x18] sm:$0xff]
        %v262 = vld [vmem:[%s4] sm:$0x1]
        %v264 = vperm.slane %v262, 0
        %vm266 = vcmask 261120
        %v268 = vsel %vm266, %v257, 0
        %270 = vmatpush.msra.mxu0 0.0
        %271 = vmatpush.msra.mxu0 0.0
        %272 = vmatpush.msra.mxu0 0.0
        %273 = vmatpush.msra.mxu0 0.0
        %274 = vmatpush.msra.mxu0 0.0
        %275 = vmatpush.msra.mxu0 0.0
        %276 = vmatpush.msra.mxu0 0.0
        %277 = vmatpush.msra.mxu0 0.0
        %278 = vmatpush.msra.mxu0 0.0
        %279 = vmatpush.msra.mxu0 0.0
        %280 = vmatpush.msra.mxu0 0.0
        %281 = vmatpush.msra.mxu0 0.0
        %282 = vmatpush.msra.mxu0 %v261
        %283 = vmatpush.msra.mxu0 %v260
        %284 = vmatpush.msra.mxu0 %v259
        %285 = vmatpush.msra.mxu0 %v258
        %286 = vmatmul.f32.gmra.mxu0 %v268
        %v287 = vpop.f32.mrf.mxu0
        %v288 = vadd.f32 %v264, %v287
        %289 = vdwg.mxu0
        %290 = vst.msk [vmem:[%s215] sm:$0xff] %vm233, %v288
        %s291 = sand.u32 %s137, 1
        %s292 = scalar_lea.sflag [#allocation3], %s291
        %s293 = sand.u32 %s137, 1
        %s294 = smul.addr %s293, 8
        %s295 = scalar_lea.vmem [#allocation2], %s294
        // Predicated region
        $region41: #{autoencoder_forward.1} parent=39 // pred_check
          %p296 = pneg %p147
        $region42: #{autoencoder_forward.1} parent=39 // pred_check_branch
          %298 = sbr.rel (%p296) target = $region44
        $region43: #{autoencoder_forward.1} parent=39 // pred_region
          %300 = vsyncadd %s292, 0
          %s301 = smul.addr %s19, 8
          %s302 = scalar_lea.hbm %s5, %s301
          %s304 = sshll.u32 %s295, 4
          %s305 = int_to_ptr.vmem [resolvable:$true] %s304
          %s306 = sshll.u32 %s302, 4
          %s307 = int_to_ptr.hbm [resolvable:$true] %s306
          %309 = dma.vmem_to_hbm [thread:$0]  %s305, 128, %s307, %s292
        $region44: #{autoencoder_forward.1} parent=39 // pred_fallthru
          _
      $region40: #{autoencoder_forward.1} parent=5 // pred_fallthru
        _
      %p310 = scmp.le.s32.totalorder 2, %s14
      // Predicated region
      $region45: #{autoencoder_forward.1} parent=5 // pred_check
        %p311 = pneg %p310
      $region46: #{autoencoder_forward.1} parent=5 // pred_check_branch
        %313 = sbr.rel (%p311) target = $region48
      $region47: #{autoencoder_forward.1} parent=5 // pred_region
        %s314 = ssub.s32 %s14, 2
        // Predicated region
        $region49: #{autoencoder_forward.1} parent=47 // pred_check
          %p315 = pneg %p153
        $region50: #{autoencoder_forward.1} parent=47 // pred_check_branch
          %317 = sbr.rel (%p315) target = $region52
        $region51: #{autoencoder_forward.1} parent=47 // pred_region
          %s318 = sand.u32 %s138, 1
          %s319 = scalar_lea.sflag [#allocation3], %s318
          %s320 = sand.u32 %s138, 1
          %s321 = smul.addr %s320, 8
          %s322 = scalar_lea.vmem [#allocation2], %s321
          %324 = dma.done %s319, 128
        $region52: #{autoencoder_forward.1} parent=47 // pred_fallthru
          _
      $region48: #{autoencoder_forward.1} parent=5 // pred_fallthru
        _
    $region6: #{autoencoder_forward.1} parent=1 // loop_footer
      %s18 = sadd.s32 1, %s14
    $region7: #{autoencoder_forward.1} parent=1 // loop_footer_branch
      %13 = sbr.rel target = $region3
    $region8: #{autoencoder_forward.1} parent=1 // loop_exit
      _
    %325 = vsyncpa [#allocation3], 1
    %s326 = scalar_lea.sflag [#allocation3], 1
    %327 = vsyncpa %s326, 1

</llo_original>
